<compile_context>
chip_gen: v5e
topology: v5e:2x2
jax: 0.10.0
libtpu: 0.0.40
codegen_flags: <defaults>
</compile_context>

<pallas_src>
import jax
import jax.numpy as jnp
from jax.experimental import pallas as pl
from jax.experimental.pallas import tpu as pltpu


def _round_up(x, m):
    return (x + m - 1) // m * m


def _embed_kernel(idx_ref, table_ref, out_ref):
    # idx_ref:   (tile_n, 1) int32 — category id per token (column layout)
    # table_ref: (C_pad, D)        — category-padded table, VMEM-resident
    # out_ref:   (tile_n, D)       — per-tile output slab (true embedding width)
    tile_n = out_ref.shape[0]
    c_pad = table_ref.shape[0]

    sub = min(256, tile_n)                   # keep one-hot near-vreg (v5e guard)
    n_chunks = (tile_n + sub - 1) // sub     # static, short trip count
    for c in range(n_chunks):
        lo = c * sub
        sz = min(sub, tile_n - lo)
        idx_col = idx_ref[pl.ds(lo, sz), :]                          # (sz, 1)
        cats = jax.lax.broadcasted_iota(jnp.int32, (sz, c_pad), 1)   # (sz, C_pad)
        onehot = (idx_col == cats).astype(table_ref.dtype)           # lane bcast
        # Row gather as a one-hot MXU matmul; HIGHEST precision keeps f32 rows
        # bit-exact (the 1.0 * row products reconstruct the full f32 mantissa).
        out_ref[pl.ds(lo, sz), :] = jnp.dot(
            onehot,
            table_ref[...],
            preferred_element_type=jnp.float32,
            precision=jax.lax.Precision.HIGHEST,
        ).astype(out_ref.dtype)


def _embedding_lookup(cat_idx, table_p, max_tile_n):
    """out[..., :] = table[cat_idx[...], :]  (nn.Embedding forward).

    Out-of-range / negative indices yield a zero row instead of raising
    (torch would raise); forward-only semantics.
    """
    idx_shape = cat_idx.shape
    c_pad, d = table_p.shape
    n = 1
    for s in idx_shape:
        n *= s
    n = int(n)

    itemsize = jnp.dtype(table_p.dtype).itemsize

    # >=2 grid steps when possible (v7x two-TC sharding of the parallel axis),
    # sublane-aligned, and scaled down with D so the double-buffered output
    # block stays around <=1 MiB.
    tile_n = min(max_tile_n, _round_up(pl.cdiv(n, 2), 8))
    while tile_n > 8 and tile_n * d * itemsize > (1 << 20):
        tile_n = _round_up(tile_n // 2, 8)
    n_pad = _round_up(n, tile_n)
    num_tiles = n_pad // tile_n

    flat_idx = cat_idx.reshape(n).astype(jnp.int32)
    idx_col = jnp.zeros((n_pad, 1), jnp.int32).at[:n, 0].set(flat_idx)

    # Usage-sized scoped-VMEM limit (default 16/32 MiB caps reject or spill for
    # moderate tables even though physical VMEM is 128/128/64 MiB).
    sub = min(256, tile_n)
    table_bytes = c_pad * d * itemsize                # single-buffered table
    io_bytes = 2 * tile_n * (4 + d * itemsize)        # double-buffered idx + out
    onehot_bytes = 2 * sub * c_pad * 4                # one-hot intermediate
    vmem_limit = int(
        min(128 << 20, max(16 << 20, 2 * (table_bytes + io_bytes + onehot_bytes)))
    )
    # TODO(synk): for tables too large to stay VMEM-resident (esp. v7x 64 MiB/TC)
    # or num_cats >~ 2K, switch to an HBM row-DMA gather (memory_space=pl.ANY +
    # per-tile manual copies) or add a D-striped second grid axis.

    cost = pl.CostEstimate(
        flops=2 * n_pad * c_pad * d,
        transcendentals=0,
        bytes_accessed=n_pad * 4 + c_pad * d * itemsize + n_pad * d * itemsize,
    )

    out_p = pl.pallas_call(
        _embed_kernel,
        out_shape=jax.ShapeDtypeStruct((n_pad, d), table_p.dtype),
        grid_spec=pltpu.PrefetchScalarGridSpec(
            num_scalar_prefetch=0,
            grid=(num_tiles,),
            in_specs=[
                # index column tile
                pl.BlockSpec((tile_n, 1), lambda i: (i, 0)),
                # resident table: constant index_map -> fetched once; single
                # buffer halves its VMEM footprint.
                pl.BlockSpec((c_pad, d), lambda i: (0, 0),
                             pipeline_mode=pl.Buffered(1)),
            ],
            out_specs=pl.BlockSpec((tile_n, d), lambda i: (i, 0)),
        ),
        compiler_params=pltpu.CompilerParams(
            dimension_semantics=("parallel",),
            vmem_limit_bytes=vmem_limit,
        ),
        cost_estimate=cost,
    )(idx_col, table_p)

    out = out_p if n_pad == n else out_p[:n]
    return out.reshape(*idx_shape, d)


class CategoryEmbeddings:
    """JAX/Pallas port of the PyTorch CategoryEmbeddings module (forward only)."""

    def __init__(self, num_cats, embedding_dim, *, key, dtype=jnp.float32,
                 max_tile_n=512):
        self.num_cats = num_cats
        self.embedding_dim = embedding_dim
        # nn.Embedding default init: N(0, 1)
        self.weight = jax.random.normal(key, (num_cats, embedding_dim), dtype=dtype)
        # Category-padded table built ONCE (hoisted out of the per-call path).
        # D is deliberately not padded: output is emitted at the true width.
        c_pad = _round_up(num_cats, 128)
        self._table_p = (
            jnp.zeros((c_pad, embedding_dim), dtype).at[:num_cats].set(self.weight)
        )
        self._max_tile_n = max_tile_n

    def __call__(self, cat_idx):
        return _embedding_lookup(cat_idx, self._table_p, self._max_tile_n)


if __name__ == "__main__":
    num_cats = 10
    embedding_dim = 32
    B, S = 2, 8

    key = jax.random.PRNGKey(0)
    k_table, k_idx = jax.random.split(key)

    emb = CategoryEmbeddings(num_cats, embedding_dim, key=k_table)
    cat_idx = jax.random.randint(k_idx, (B, S), 0, num_cats, dtype=jnp.int32)

    out = emb(cat_idx)
    out = jax.block_until_ready(out)

    # Reference: same semantics as torch.nn.Embedding forward.
    ref = jnp.take(emb.weight, cat_idx, axis=0)
    assert out.shape == (B, S, embedding_dim), out.shape
    assert jnp.allclose(out, ref, rtol=0.0, atol=1e-6), "mismatch vs reference lookup"

    print("KERNEL_OK")
</pallas_src>

<mosaic_0001>
module attributes {stable_mosaic.version = 11 : i64} {
  func.func @_embed_kernel(%arg0: i32, %arg1: memref<8x1xi32, #tpu.memory_space<vmem>>, %arg2: memref<128x32xf32, #tpu.memory_space<vmem>>, %arg3: memref<8x32xf32, #tpu.memory_space<vmem>>) attributes {dimension_semantics = [#tpu.dimension_semantics<parallel>], iteration_bounds = array<i64: 2>, scalar_prefetch = 0 : i64, scratch_operands = 0 : i64, tpu.core_type = #tpu.core_type<tc>, window_params = [{transform_indices = @transform_0, window_bounds = array<i64: 8, 1>}, {pipeline_mode = #tpu.pipeline_mode<synchronous>, transform_indices = @transform_1, window_bounds = array<i64: 128, 32>}, {transform_indices = @transform_2, window_bounds = array<i64: 8, 32>}]} {
    %c0 = arith.constant 0 : index
    %c0_0 = arith.constant 0 : index
    %0 = vector.load %arg1[%c0, %c0_0] : memref<8x1xi32, #tpu.memory_space<vmem>>, vector<8x1xi32>
    %1 = tpu.iota {dimensions = array<i32: 1>} : vector<8x128xi32>
    %2 = vector.broadcast %0 : vector<8x1xi32> to vector<8x128xi32>
    %3 = arith.cmpi eq, %2, %1 : vector<8x128xi32>
    %4 = arith.extui %3 : vector<8x128xi1> to vector<8x128xi32>
    %5 = arith.sitofp %4 : vector<8x128xi32> to vector<8x128xf32>
    %c0_1 = arith.constant 0 : index
    %c0_2 = arith.constant 0 : index
    %6 = vector.load %arg2[%c0_1, %c0_2] : memref<128x32xf32, #tpu.memory_space<vmem>>, vector<128x32xf32>
    %cst = arith.constant dense<0.000000e+00> : vector<8x32xf32>
    %7 = tpu.matmul %5, %6, %cst {dimension_numbers = #tpu.dot_dimension_numbers<[1], [0], [0], [1], [0, 0, 1, 1], [], []>, precision = #tpu.contract_precision<fp32>} : vector<8x128xf32>, vector<128x32xf32>, vector<8x32xf32> -> vector<8x32xf32>
    %c0_3 = arith.constant 0 : index
    %c0_4 = arith.constant 0 : index
    %8 = vector.load %arg3[%c0_3, %c0_4] : memref<8x32xf32, #tpu.memory_space<vmem>>, vector<8x32xf32>
    tpu.vector_store %arg3[%c0_3, %c0_4], %7 {strides = array<i32>} : memref<8x32xf32, #tpu.memory_space<vmem>>, vector<8x32xf32>,
    return
  }
  func.func @transform_0(%arg0: i32) -> (i32, i32) {
    %c0_i32 = arith.constant 0 : i32
    %c0_i32_0 = arith.constant 0 : i32
    return %arg0, %c0_i32 : i32, i32
  }
  func.func @transform_1(%arg0: i32) -> (i32, i32) {
    %c0_i32 = arith.constant 0 : i32
    %c0_i32_0 = arith.constant 0 : i32
    %c0_i32_1 = arith.constant 0 : i32
    return %c0_i32, %c0_i32_0 : i32, i32
  }
  func.func @transform_2(%arg0: i32) -> (i32, i32) {
    %c0_i32 = arith.constant 0 : i32
    %c0_i32_0 = arith.constant 0 : i32
    return %arg0, %c0_i32 : i32, i32
  }
}

</mosaic_0001>

<llo_original>
// kernel: tpu_custom_call.1
$region0: #{tpu_custom_call.1}
  #allocation0 [shape = 'u32[]', space=smem, size = 0x4, offset = 0x4, fixed_abs, tag = 'smem constant byte address 0x4 - core index']
  #allocation1 [shape = 'u32[72,128]{1,0:T(1,128)}', space=vmem, size = 0x9000, scoped, tag = 'internal scratch']
  %s0 = inlined_call_operand.vmem [shape: s32[16,1], index: 0, kind: input, shape index: {}]
  %s1 = inlined_call_operand.vmem [shape: f32[128,32], index: 1, kind: input, shape index: {}]
  %s2 = inlined_call_operand.hbm [shape: f32[16,32], index: 2, kind: output, shape index: {}]
  %s3 = sld [smem:[#allocation0]]
  $region41: #{tpu_custom_call.1} parent=0
    _
  %s5 = ssub.s32 1, %s3
  %s6 = scalar_select 0, %s5, %s3
  $region1: #{tpu_custom_call.1} parent=0
    #allocation2 [shape = 'u8[8192]{0}', space=vmem, size = 0x2000, scoped, tag = 'output window, operand 0']
    #allocation3 [shape = 's32[2]{0}', space=sflag, size = 0x8, scoped, tag = 'scoped memory for tpu_custom_call.1']
    %7 = vsyncpa [#allocation3], 0
    %s8 = scalar_lea.sflag [#allocation3], 1
    %9 = vsyncpa %s8, 0
    loop: start=0, step=1, limit=4
    $region2: #{tpu_custom_call.1} parent=1 // loop_pre_header
      _
    $region3: #{tpu_custom_call.1} parent=1 // loop_header
      %s11 = sphi 0, %s15
      %p12 = scmp.ge.s32.totalorder %s11, 4
      %s21 = sphi 0, %s23
      %s24 = sphi 0, %s21
      %s25 = sphi 0, %s24
      %s41 = sphi 0, %s25
      %s45 = sphi 0, %s45
      %s47 = sphi 0, %s45
      %s48 = sphi 0, %s47
      %s62 = sphi 0, %s48
      %s68 = sphi 0, %s70
      %s71 = sphi 0, %s68
      %s72 = sphi 0, %s71
      %s88 = sphi 0, %s72
    $region4: #{tpu_custom_call.1} parent=1 // loop_header_branch
      %14 = sbr.rel (%p12) target = $region8
    $region5: #{tpu_custom_call.1} parent=1 // loop_body
      %s16 = ssub.s32 %s11, 1
      %s17 = ssub.s32 %s11, 2
      %s18 = sadd.s32 %s11, 1
      %s19 = ssub.s32 %s11, %s18
      %p20 = scmp.eq.s32.totalorder %s19, 0
      %s22 = sadd.s32 %s21, 1
      %s23 = scalar_select %p20, %s21, %s22
      %p26 = pneg %p20
      %p27 = scmp.eq.s32.totalorder %s11, 1
      %p28 = por %p26, %p27
      %p29 = scmp.ne.s32.totalorder %s21, %s24
      %p30 = scmp.eq.s32.totalorder %s11, 0
      %p31 = por %p29, %p30
      %p32 = scmp.ne.s32.totalorder %s21, %s24
      %p33 = scmp.eq.s32.totalorder %s16, 1
      %p34 = por %p32, %p33
      %p35 = scmp.ne.s32.totalorder %s24, %s25
      %p36 = scmp.eq.s32.totalorder %s16, 0
      %p37 = por %p35, %p36
      %p38 = scmp.ne.s32.totalorder %s24, %s25
      %p39 = scmp.eq.s32.totalorder %s17, 1
      %p40 = por %p38, %p39
      %p42 = scmp.ne.s32.totalorder %s25, %s41
      %p43 = scmp.eq.s32.totalorder %s17, 0
      %p44 = por %p42, %p43
      %s46 = sadd.s32 %s45, 1
      %p49 = scmp.eq.s32.totalorder %s11, 1
      %p50 = scmp.ne.s32.totalorder %s45, %s47
      %p51 = scmp.eq.s32.totalorder %s11, 0
      %p52 = por %p50, %p51
      %p53 = scmp.ne.s32.totalorder %s45, %s47
      %p54 = scmp.eq.s32.totalorder %s16, 1
      %p55 = por %p53, %p54
      %p56 = scmp.ne.s32.totalorder %s47, %s48
      %p57 = scmp.eq.s32.totalorder %s16, 0
      %p58 = por %p56, %p57
      %p59 = scmp.ne.s32.totalorder %s47, %s48
      %p60 = scmp.eq.s32.totalorder %s17, 1
      %p61 = por %p59, %p60
      %p63 = scmp.ne.s32.totalorder %s48, %s62
      %p64 = scmp.eq.s32.totalorder %s17, 0
      %p65 = por %p63, %p64
      %s66 = ssub.s32 %s11, %s18
      %p67 = scmp.eq.s32.totalorder %s66, 0
      %s69 = sadd.s32 %s68, 1
      %s70 = scalar_select %p67, %s68, %s69
      %p73 = pneg %p67
      %p74 = scmp.eq.s32.totalorder %s11, 1
      %p75 = por %p73, %p74
      %p76 = scmp.ne.s32.totalorder %s68, %s71
      %p77 = scmp.eq.s32.totalorder %s11, 0
      %p78 = por %p76, %p77
      %p79 = scmp.ne.s32.totalorder %s68, %s71
      %p80 = scmp.eq.s32.totalorder %s16, 1
      %p81 = por %p79, %p80
      %p82 = scmp.ne.s32.totalorder %s71, %s72
      %p83 = scmp.eq.s32.totalorder %s16, 0
      %p84 = por %p82, %p83
      %p85 = scmp.ne.s32.totalorder %s71, %s72
      %p86 = scmp.eq.s32.totalorder %s17, 1
      %p87 = por %p85, %p86
      %p89 = scmp.ne.s32.totalorder %s72, %s88
      %p90 = scmp.eq.s32.totalorder %s17, 0
      %p91 = por %p89, %p90
      %p92 = scmp.le.s32.totalorder 1, %s11
      %p93 = scmp.lt.s32.totalorder %s11, 3
      %p94 = pnand %p92, %p93
      %p95 = pneg %p94
      // Predicated region
      $region9: #{tpu_custom_call.1} parent=5 // pred_check
        _
      $region10: #{tpu_custom_call.1} parent=5 // pred_check_branch
        %97 = sbr.rel (%p94) target = $region12
      $region11: #{tpu_custom_call.1} parent=5 // pred_region
        %s98 = ssub.s32 %s11, 1
        // Predicated region
        $region13: #{tpu_custom_call.1} parent=11 // pred_check
          %p99 = pneg %p58
        $region14: #{tpu_custom_call.1} parent=11 // pred_check_branch
          %101 = sbr.rel (%p99) target = $region16
        $region15: #{tpu_custom_call.1} parent=11 // pred_region
          _
        $region16: #{tpu_custom_call.1} parent=11 // pred_fallthru
          _
      $region12: #{tpu_custom_call.1} parent=5 // pred_fallthru
        _
      %p102 = scmp.lt.s32.totalorder %s11, 2
      // Predicated region
      $region17: #{tpu_custom_call.1} parent=5 // pred_check
        %p103 = pneg %p102
      $region18: #{tpu_custom_call.1} parent=5 // pred_check_branch
        %105 = sbr.rel (%p103) target = $region20
      $region19: #{tpu_custom_call.1} parent=5 // pred_region
        // Predicated region
        $region21: #{tpu_custom_call.1} parent=19 // pred_check
          %p106 = pneg %p31
        $region22: #{tpu_custom_call.1} parent=19 // pred_check_branch
          %108 = sbr.rel (%p106) target = $region24
        $region23: #{tpu_custom_call.1} parent=19 // pred_region
          %p109 = scmp.lt.s32.totalorder %s11, 1
          %s110 = scalar_select %p109, %s11, 1
          %s111 = smul.addr %s110, 8
          %s112 = scalar_lea.vmem %s0, %s111
        $region24: #{tpu_custom_call.1} parent=19 // pred_fallthru
          _
      $region20: #{tpu_custom_call.1} parent=5 // pred_fallthru
        _
      %p113 = scmp.le.s32.totalorder 1, %s11
      %p114 = scmp.lt.s32.totalorder %s11, 3
      %p115 = pnand %p113, %p114
      %p116 = pneg %p115
      // Predicated region
      $region25: #{tpu_custom_call.1} parent=5 // pred_check
        _
      $region26: #{tpu_custom_call.1} parent=5 // pred_check_branch
        %118 = sbr.rel (%p115) target = $region28
      $region27: #{tpu_custom_call.1} parent=5 // pred_region
        %s119 = ssub.s32 %s11, 1
        %p120 = scmp.lt.s32.totalorder %s16, 1
        %s121 = scalar_select %p120, %s16, 1
        %s122 = smul.addr %s121, 8
        %s123 = scalar_lea.vmem %s0, %s122
        %p124 = pneg %p37
        %p125 = pneg %p34
        %p126 = pneg %p58
        %p127 = pneg %p55
        %p128 = pneg %p84
        %p129 = pneg %p81
        %s130 = sand.u32 %s71, 1
        %s131 = scalar_lea.sflag [#allocation3], %s130
        %s132 = sand.u32 %s71, 1
        %s133 = smul.addr %s132, 8
        %s134 = scalar_lea.vmem [#allocation2], %s133
        %p135 = scmp.lt.s32.totalorder %s16, 1
        %s136 = scalar_select %p135, %s16, 1
        %s137 = smul.addr %s136, 8
        %s138 = scalar_lea.vmem %s0, %s137
        %v139 = vld [vmem:[%s138] sm:$0xff]
        %v140 = vlaneseq
        %v141 = vand.u32 %v140, 127
        %142 = vset.pattern.permute.xlu0 0
        %143 = vperm.xlu0 %142, %v139
        %v144 = vpop.permute.xlu0 %143
        %vm145 = vcmp.eq.s32.totalorder %v144, %v141
        %v146 = vsel %vm145, 1, 0
        %v147 = vcvt.s32.f32 %v146
        %v148 = vld [vmem:[%s1] sm:$0xff]
        %v149 = vld [vmem:[%s1 + $0x8] sm:$0xff]
        %v150 = vld [vmem:[%s1 + $0x10] sm:$0xff]
        %v151 = vld [vmem:[%s1 + $0x18] sm:$0xff]
        %v152 = vld [vmem:[%s1 + $0x20] sm:$0xff]
        %v153 = vld [vmem:[%s1 + $0x28] sm:$0xff]
        %v154 = vld [vmem:[%s1 + $0x30] sm:$0xff]
        %v155 = vld [vmem:[%s1 + $0x38] sm:$0xff]
        %v156 = vld [vmem:[%s1 + $0x40] sm:$0xff]
        %v157 = vld [vmem:[%s1 + $0x48] sm:$0xff]
        %v158 = vld [vmem:[%s1 + $0x50] sm:$0xff]
        %v159 = vld [vmem:[%s1 + $0x58] sm:$0xff]
        %v160 = vld [vmem:[%s1 + $0x60] sm:$0xff]
        %v161 = vld [vmem:[%s1 + $0x68] sm:$0xff]
        %v162 = vld [vmem:[%s1 + $0x70] sm:$0xff]
        %v163 = vld [vmem:[%s1 + $0x78] sm:$0xff]
        %v164 = vand.u32 %v163, 4294901760
        %165 = vmatpush.msra.mxu0 %v164
        %v166 = vand.u32 %v162, 4294901760
        %167 = vmatpush.msra.mxu0 %v166
        %v168 = vand.u32 %v161, 4294901760
        %169 = vmatpush.msra.mxu0 %v168
        %v170 = vand.u32 %v160, 4294901760
        %171 = vmatpush.msra.mxu0 %v170
        %v172 = vand.u32 %v159, 4294901760
        %173 = vmatpush.msra.mxu0 %v172
        %v174 = vand.u32 %v158, 4294901760
        %175 = vmatpush.msra.mxu0 %v174
        %v176 = vand.u32 %v157, 4294901760
        %177 = vmatpush.msra.mxu0 %v176
        %v178 = vand.u32 %v156, 4294901760
        %179 = vmatpush.msra.mxu0 %v178
        %v180 = vand.u32 %v155, 4294901760
        %181 = vmatpush.msra.mxu0 %v180
        %v182 = vand.u32 %v154, 4294901760
        %183 = vmatpush.msra.mxu0 %v182
        %v184 = vand.u32 %v153, 4294901760
        %185 = vmatpush.msra.mxu0 %v184
        %v186 = vand.u32 %v152, 4294901760
        %187 = vmatpush.msra.mxu0 %v186
        %v188 = vand.u32 %v151, 4294901760
        %189 = vmatpush.msra.mxu0 %v188
        %v190 = vand.u32 %v150, 4294901760
        %191 = vmatpush.msra.mxu0 %v190
        %v192 = vand.u32 %v149, 4294901760
        %193 = vmatpush.msra.mxu0 %v192
        %v194 = vand.u32 %v148, 4294901760
        %195 = vmatpush.msra.mxu0 %v194
        %v196 = vand.u32 %v147, 4294901760
        %v197 = vsub.f32 %v147, %v196
        %v198 = vand.u32 %v197, 4294901760
        %v199 = vsub.f32 %v197, %v198
        %v200 = vand.u32 %v199, 4294901760
        %201 = vmatmul.f32.gmra.mxu0 %v200
        %v202 = vpop.f32.mrf.mxu0
        %v203 = vadd.f32 0.0, %v202
        %204 = vdwg.mxu0
        %v205 = vand.u32 %v163, 4294901760
        %v206 = vsub.f32 %v163, %v205
        %v207 = vand.u32 %v206, 4294901760
        %v208 = vsub.f32 %v206, %v207
        %v209 = vand.u32 %v208, 4294901760
        %210 = vmatpush.msra.mxu0 %v209
        %v211 = vand.u32 %v162, 4294901760
        %v212 = vsub.f32 %v162, %v211
        %v213 = vand.u32 %v212, 4294901760
        %v214 = vsub.f32 %v212, %v213
        %v215 = vand.u32 %v214, 4294901760
        %216 = vmatpush.msra.mxu0 %v215
        %v217 = vand.u32 %v161, 4294901760
        %v218 = vsub.f32 %v161, %v217
        %v219 = vand.u32 %v218, 4294901760
        %v220 = vsub.f32 %v218, %v219
        %v221 = vand.u32 %v220, 4294901760
        %222 = vmatpush.msra.mxu0 %v221
        %v223 = vand.u32 %v160, 4294901760
        %v224 = vsub.f32 %v160, %v223
        %v225 = vand.u32 %v224, 4294901760
        %v226 = vsub.f32 %v224, %v225
        %v227 = vand.u32 %v226, 4294901760
        %228 = vmatpush.msra.mxu0 %v227
        %v229 = vand.u32 %v159, 4294901760
        %v230 = vsub.f32 %v159, %v229
        %v231 = vand.u32 %v230, 4294901760
        %v232 = vsub.f32 %v230, %v231
        %v233 = vand.u32 %v232, 4294901760
        %234 = vmatpush.msra.mxu0 %v233
        %v235 = vand.u32 %v158, 4294901760
        %v236 = vsub.f32 %v158, %v235
        %v237 = vand.u32 %v236, 4294901760
        %v238 = vsub.f32 %v236, %v237
        %v239 = vand.u32 %v238, 4294901760
        %240 = vmatpush.msra.mxu0 %v239
        %v241 = vand.u32 %v157, 4294901760
        %v242 = vsub.f32 %v157, %v241
        %v243 = vand.u32 %v242, 4294901760
        %v244 = vsub.f32 %v242, %v243
        %v245 = vand.u32 %v244, 4294901760
        %246 = vmatpush.msra.mxu0 %v245
        %v247 = vand.u32 %v156, 4294901760
        %v248 = vsub.f32 %v156, %v247
        %v249 = vand.u32 %v248, 4294901760
        %v250 = vsub.f32 %v248, %v249
        %v251 = vand.u32 %v250, 4294901760
        %252 = vmatpush.msra.mxu0 %v251
        %v253 = vand.u32 %v155, 4294901760
        %v254 = vsub.f32 %v155, %v253
        %v255 = vand.u32 %v254, 4294901760
        %v256 = vsub.f32 %v254, %v255
        %v257 = vand.u32 %v256, 4294901760
        %258 = vmatpush.msra.mxu0 %v257
        %v259 = vand.u32 %v154, 4294901760
        %v260 = vsub.f32 %v154, %v259
        %v261 = vand.u32 %v260, 4294901760
        %v262 = vsub.f32 %v260, %v261
        %v263 = vand.u32 %v262, 4294901760
        %264 = vmatpush.msra.mxu0 %v263
        %v265 = vand.u32 %v153, 4294901760
        %v266 = vsub.f32 %v153, %v265
        %v267 = vand.u32 %v266, 4294901760
        %v268 = vsub.f32 %v266, %v267
        %v269 = vand.u32 %v268, 4294901760
        %270 = vmatpush.msra.mxu0 %v269
        %v271 = vand.u32 %v152, 4294901760
        %v272 = vsub.f32 %v152, %v271
        %v273 = vand.u32 %v272, 4294901760
        %v274 = vsub.f32 %v272, %v273
        %v275 = vand.u32 %v274, 4294901760
        %276 = vmatpush.msra.mxu0 %v275
        %v277 = vand.u32 %v151, 4294901760
        %v278 = vsub.f32 %v151, %v277
        %v279 = vand.u32 %v278, 4294901760
        %v280 = vsub.f32 %v278, %v279
        %v281 = vand.u32 %v280, 4294901760
        %282 = vmatpush.msra.mxu0 %v281
        %v283 = vand.u32 %v150, 4294901760
        %v284 = vsub.f32 %v150, %v283
        %v285 = vand.u32 %v284, 4294901760
        %v286 = vsub.f32 %v284, %v285
        %v287 = vand.u32 %v286, 4294901760
        %288 = vmatpush.msra.mxu0 %v287
        %v289 = vand.u32 %v149, 4294901760
        %v290 = vsub.f32 %v149, %v289
        %v291 = vand.u32 %v290, 4294901760
        %v292 = vsub.f32 %v290, %v291
        %v293 = vand.u32 %v292, 4294901760
        %294 = vmatpush.msra.mxu0 %v293
        %v295 = vand.u32 %v148, 4294901760
        %v296 = vsub.f32 %v148, %v295
        %v297 = vand.u32 %v296, 4294901760
        %v298 = vsub.f32 %v296, %v297
        %v299 = vand.u32 %v298, 4294901760
        %300 = vmatpush.msra.mxu0 %v299
        %v301 = vand.u32 %v147, 4294901760
        %302 = vmatmul.f32.gmra.mxu0 %v301
        %v303 = vpop.f32.mrf.mxu0
        %v304 = vadd.f32 %v203, %v303
        %305 = vdwg.mxu0
        %v306 = vand.u32 %v163, 4294901760
        %v307 = vsub.f32 %v163, %v306
        %308 = vmatpush.msra.mxu0 %v307
        %v309 = vand.u32 %v162, 4294901760
        %v310 = vsub.f32 %v162, %v309
        %311 = vmatpush.msra.mxu0 %v310
        %v312 = vand.u32 %v161, 4294901760
        %v313 = vsub.f32 %v161, %v312
        %314 = vmatpush.msra.mxu0 %v313
        %v315 = vand.u32 %v160, 4294901760
        %v316 = vsub.f32 %v160, %v315
        %317 = vmatpush.msra.mxu0 %v316
        %v318 = vand.u32 %v159, 4294901760
        %v319 = vsub.f32 %v159, %v318
        %320 = vmatpush.msra.mxu0 %v319
        %v321 = vand.u32 %v158, 4294901760
        %v322 = vsub.f32 %v158, %v321
        %323 = vmatpush.msra.mxu0 %v322
        %v324 = vand.u32 %v157, 4294901760
        %v325 = vsub.f32 %v157, %v324
        %326 = vmatpush.msra.mxu0 %v325
        %v327 = vand.u32 %v156, 4294901760
        %v328 = vsub.f32 %v156, %v327
        %329 = vmatpush.msra.mxu0 %v328
        %v330 = vand.u32 %v155, 4294901760
        %v331 = vsub.f32 %v155, %v330
        %332 = vmatpush.msra.mxu0 %v331
        %v333 = vand.u32 %v154, 4294901760
        %v334 = vsub.f32 %v154, %v333
        %335 = vmatpush.msra.mxu0 %v334
        %v336 = vand.u32 %v153, 4294901760
        %v337 = vsub.f32 %v153, %v336
        %338 = vmatpush.msra.mxu0 %v337
        %v339 = vand.u32 %v152, 4294901760
        %v340 = vsub.f32 %v152, %v339
        %341 = vmatpush.msra.mxu0 %v340
        %v342 = vand.u32 %v151, 4294901760
        %v343 = vsub.f32 %v151, %v342
        %344 = vmatpush.msra.mxu0 %v343
        %v345 = vand.u32 %v150, 4294901760
        %v346 = vsub.f32 %v150, %v345
        %347 = vmatpush.msra.mxu0 %v346
        %v348 = vand.u32 %v149, 4294901760
        %v349 = vsub.f32 %v149, %v348
        %350 = vmatpush.msra.mxu0 %v349
        %v351 = vand.u32 %v148, 4294901760
        %v352 = vsub.f32 %v148, %v351
        %353 = vmatpush.msra.mxu0 %v352
        %v354 = vand.u32 %v147, 4294901760
        %v355 = vsub.f32 %v147, %v354
        %356 = vmatmul.f32.gmra.mxu0 %v355
        %v357 = vpop.f32.mrf.mxu0
        %v358 = vadd.f32 %v304, %v357
        %359 = vdwg.mxu0
        %v360 = vand.u32 %v163, 4294901760
        %361 = vmatpush.msra.mxu0 %v360
        %v362 = vand.u32 %v162, 4294901760
        %363 = vmatpush.msra.mxu0 %v362
        %v364 = vand.u32 %v161, 4294901760
        %365 = vmatpush.msra.mxu0 %v364
        %v366 = vand.u32 %v160, 4294901760
        %367 = vmatpush.msra.mxu0 %v366
        %v368 = vand.u32 %v159, 4294901760
        %369 = vmatpush.msra.mxu0 %v368
        %v370 = vand.u32 %v158, 4294901760
        %371 = vmatpush.msra.mxu0 %v370
        %v372 = vand.u32 %v157, 4294901760
        %373 = vmatpush.msra.mxu0 %v372
        %v374 = vand.u32 %v156, 4294901760
        %375 = vmatpush.msra.mxu0 %v374
        %v376 = vand.u32 %v155, 4294901760
        %377 = vmatpush.msra.mxu0 %v376
        %v378 = vand.u32 %v154, 4294901760
        %379 = vmatpush.msra.mxu0 %v378
        %v380 = vand.u32 %v153, 4294901760
        %381 = vmatpush.msra.mxu0 %v380
        %v382 = vand.u32 %v152, 4294901760
        %383 = vmatpush.msra.mxu0 %v382
        %v384 = vand.u32 %v151, 4294901760
        %385 = vmatpush.msra.mxu0 %v384
        %v386 = vand.u32 %v150, 4294901760
        %387 = vmatpush.msra.mxu0 %v386
        %v388 = vand.u32 %v149, 4294901760
        %389 = vmatpush.msra.mxu0 %v388
        %v390 = vand.u32 %v148, 4294901760
        %391 = vmatpush.msra.mxu0 %v390
        %v392 = vand.u32 %v147, 4294901760
        %v393 = vsub.f32 %v147, %v392
        %v394 = vand.u32 %v393, 4294901760
        %395 = vmatmul.f32.gmra.mxu0 %v394
        %v396 = vpop.f32.mrf.mxu0
        %v397 = vadd.f32 %v358, %v396
        %398 = vdwg.mxu0
        %v399 = vand.u32 %v163, 4294901760
        %v400 = vsub.f32 %v163, %v399
        %v401 = vand.u32 %v400, 4294901760
        %402 = vmatpush.msra.mxu0 %v401
        %v403 = vand.u32 %v162, 4294901760
        %v404 = vsub.f32 %v162, %v403
        %v405 = vand.u32 %v404, 4294901760
        %406 = vmatpush.msra.mxu0 %v405
        %v407 = vand.u32 %v161, 4294901760
        %v408 = vsub.f32 %v161, %v407
        %v409 = vand.u32 %v408, 4294901760
        %410 = vmatpush.msra.mxu0 %v409
        %v411 = vand.u32 %v160, 4294901760
        %v412 = vsub.f32 %v160, %v411
        %v413 = vand.u32 %v412, 4294901760
        %414 = vmatpush.msra.mxu0 %v413
        %v415 = vand.u32 %v159, 4294901760
        %v416 = vsub.f32 %v159, %v415
        %v417 = vand.u32 %v416, 4294901760
        %418 = vmatpush.msra.mxu0 %v417
        %v419 = vand.u32 %v158, 4294901760
        %v420 = vsub.f32 %v158, %v419
        %v421 = vand.u32 %v420, 4294901760
        %422 = vmatpush.msra.mxu0 %v421
        %v423 = vand.u32 %v157, 4294901760
        %v424 = vsub.f32 %v157, %v423
        %v425 = vand.u32 %v424, 4294901760
        %426 = vmatpush.msra.mxu0 %v425
        %v427 = vand.u32 %v156, 4294901760
        %v428 = vsub.f32 %v156, %v427
        %v429 = vand.u32 %v428, 4294901760
        %430 = vmatpush.msra.mxu0 %v429
        %v431 = vand.u32 %v155, 4294901760
        %v432 = vsub.f32 %v155, %v431
        %v433 = vand.u32 %v432, 4294901760
        %434 = vmatpush.msra.mxu0 %v433
        %v435 = vand.u32 %v154, 4294901760
        %v436 = vsub.f32 %v154, %v435
        %v437 = vand.u32 %v436, 4294901760
        %438 = vmatpush.msra.mxu0 %v437
        %v439 = vand.u32 %v153, 4294901760
        %v440 = vsub.f32 %v153, %v439
        %v441 = vand.u32 %v440, 4294901760
        %442 = vmatpush.msra.mxu0 %v441
        %v443 = vand.u32 %v152, 4294901760
        %v444 = vsub.f32 %v152, %v443
        %v445 = vand.u32 %v444, 4294901760
        %446 = vmatpush.msra.mxu0 %v445
        %v447 = vand.u32 %v151, 4294901760
        %v448 = vsub.f32 %v151, %v447
        %v449 = vand.u32 %v448, 4294901760
        %450 = vmatpush.msra.mxu0 %v449
        %v451 = vand.u32 %v150, 4294901760
        %v452 = vsub.f32 %v150, %v451
        %v453 = vand.u32 %v452, 4294901760
        %454 = vmatpush.msra.mxu0 %v453
        %v455 = vand.u32 %v149, 4294901760
        %v456 = vsub.f32 %v149, %v455
        %v457 = vand.u32 %v456, 4294901760
        %458 = vmatpush.msra.mxu0 %v457
        %v459 = vand.u32 %v148, 4294901760
        %v460 = vsub.f32 %v148, %v459
        %v461 = vand.u32 %v460, 4294901760
        %462 = vmatpush.msra.mxu0 %v461
        %v463 = vand.u32 %v147, 4294901760
        %464 = vmatmul.f32.gmra.mxu0 %v463
        %v465 = vpop.f32.mrf.mxu0
        %v466 = vadd.f32 %v397, %v465
        %467 = vdwg.mxu0
        %v468 = vand.u32 %v163, 4294901760
        %469 = vmatpush.msra.mxu0 %v468
        %v470 = vand.u32 %v162, 4294901760
        %471 = vmatpush.msra.mxu0 %v470
        %v472 = vand.u32 %v161, 4294901760
        %473 = vmatpush.msra.mxu0 %v472
        %v474 = vand.u32 %v160, 4294901760
        %475 = vmatpush.msra.mxu0 %v474
        %v476 = vand.u32 %v159, 4294901760
        %477 = vmatpush.msra.mxu0 %v476
        %v478 = vand.u32 %v158, 4294901760
        %479 = vmatpush.msra.mxu0 %v478
        %v480 = vand.u32 %v157, 4294901760
        %481 = vmatpush.msra.mxu0 %v480
        %v482 = vand.u32 %v156, 4294901760
        %483 = vmatpush.msra.mxu0 %v482
        %v484 = vand.u32 %v155, 4294901760
        %485 = vmatpush.msra.mxu0 %v484
        %v486 = vand.u32 %v154, 4294901760
        %487 = vmatpush.msra.mxu0 %v486
        %v488 = vand.u32 %v153, 4294901760
        %489 = vmatpush.msra.mxu0 %v488
        %v490 = vand.u32 %v152, 4294901760
        %491 = vmatpush.msra.mxu0 %v490
        %v492 = vand.u32 %v151, 4294901760
        %493 = vmatpush.msra.mxu0 %v492
        %v494 = vand.u32 %v150, 4294901760
        %495 = vmatpush.msra.mxu0 %v494
        %v496 = vand.u32 %v149, 4294901760
        %497 = vmatpush.msra.mxu0 %v496
        %v498 = vand.u32 %v148, 4294901760
        %499 = vmatpush.msra.mxu0 %v498
        %v500 = vand.u32 %v147, 4294901760
        %501 = vmatmul.f32.gmra.mxu0 %v500
        %v502 = vpop.f32.mrf.mxu0
        %v503 = vadd.f32 %v466, %v502
        %504 = vdwg.mxu0
        %vm505 = vcmask 261120
        %506 = vst.msk [vmem:[%s134] sm:$0xff] %vm505, %v503
        %s507 = sand.u32 %s71, 1
        %s508 = scalar_lea.sflag [#allocation3], %s507
        %s509 = sand.u32 %s71, 1
        %s510 = smul.addr %s509, 8
        %s511 = scalar_lea.vmem [#allocation2], %s510
        // Predicated region
        $region29: #{tpu_custom_call.1} parent=27 // pred_check
          %p512 = pneg %p81
        $region30: #{tpu_custom_call.1} parent=27 // pred_check_branch
          %514 = sbr.rel (%p512) target = $region32
        $region31: #{tpu_custom_call.1} parent=27 // pred_region
          %516 = vsyncadd %s508, 0
          %s517 = smul.addr %s16, 8
          %s518 = scalar_lea.hbm %s2, %s517
          %s520 = sshll.u32 %s511, 4
          %s521 = int_to_ptr.vmem [resolvable:$true] %s520
          %s522 = sshll.u32 %s518, 4
          %s523 = int_to_ptr.hbm [resolvable:$true] %s522
          %525 = dma.vmem_to_hbm [thread:$0]  %s521, 128, %s523, %s508
        $region32: #{tpu_custom_call.1} parent=27 // pred_fallthru
          _
      $region28: #{tpu_custom_call.1} parent=5 // pred_fallthru
        _
      %p526 = scmp.le.s32.totalorder 2, %s11
      // Predicated region
      $region33: #{tpu_custom_call.1} parent=5 // pred_check
        %p527 = pneg %p526
      $region34: #{tpu_custom_call.1} parent=5 // pred_check_branch
        %529 = sbr.rel (%p527) target = $region36
      $region35: #{tpu_custom_call.1} parent=5 // pred_region
        %s530 = ssub.s32 %s11, 2
        // Predicated region
        $region37: #{tpu_custom_call.1} parent=35 // pred_check
          %p531 = pneg %p87
        $region38: #{tpu_custom_call.1} parent=35 // pred_check_branch
          %533 = sbr.rel (%p531) target = $region40
        $region39: #{tpu_custom_call.1} parent=35 // pred_region
          %s534 = sand.u32 %s72, 1
          %s535 = scalar_lea.sflag [#allocation3], %s534
          %s536 = sand.u32 %s72, 1
          %s537 = smul.addr %s536, 8
          %s538 = scalar_lea.vmem [#allocation2], %s537
          %540 = dma.done %s535, 128
        $region40: #{tpu_custom_call.1} parent=35 // pred_fallthru
          _
      $region36: #{tpu_custom_call.1} parent=5 // pred_fallthru
        _
    $region6: #{tpu_custom_call.1} parent=1 // loop_footer
      %s15 = sadd.s32 1, %s11
    $region7: #{tpu_custom_call.1} parent=1 // loop_footer_branch
      %10 = sbr.rel target = $region3
    $region8: #{tpu_custom_call.1} parent=1 // loop_exit
      _
    %541 = vsyncpa [#allocation3], 1
    %s542 = scalar_lea.sflag [#allocation3], 1
    %543 = vsyncpa %s542, 1

</llo_original>
